<compile_context>
chip_gen: v5e
topology: v5e:2x2
jax: 0.10.0
libtpu: 0.0.40
codegen_flags: <defaults>
</compile_context>

<pallas_src>
import functools

import jax
import jax.numpy as jnp
from jax.experimental import pallas as pl
from jax.experimental.pallas import tpu as pltpu

GROWTH = 32
BN_SIZE = 4
BOTTLENECK = BN_SIZE * GROWTH          # 128
BLOCK_CONFIG = (6, 12, 24, 16)
NUM_INIT_FEATURES = 64

_VMEM_LIMIT = 48 * 1024 * 1024         # < 64 MiB physical on v7x, > default scoped limit
_ROW_TILE = 512                        # M-tile for row-pipelined kernels


# ------------------------------- helpers -------------------------------------

def _round_up(x, m):
    return ((x + m - 1) // m) * m


def _row_tiling(m, target=_ROW_TILE):
    """(tile_rows, padded_rows) for a 1-D M grid."""
    if m >= target:
        return target, _round_up(m, target)
    mp = _round_up(m, 8)
    return mp, mp


def _pad_rows(x, m_pad):
    m = x.shape[0]
    if m == m_pad:
        return x
    return jnp.pad(x, ((0, m_pad - m), (0, 0)))


def _im2col_7x7(x, stride, pad):
    """im2col for the single 7x7 stem conv only ((kh, kw, cin) row order)."""
    b, h, w, c = x.shape
    xp = jnp.pad(x, ((0, 0), (pad, pad), (pad, pad), (0, 0)))
    ho = (h + 2 * pad - 7) // stride + 1
    wo = (w + 2 * pad - 7) // stride + 1
    slabs = []
    for i in range(7):
        for j in range(7):
            slabs.append(xp[:, i:i + (ho - 1) * stride + 1:stride,
                            j:j + (wo - 1) * stride + 1:stride, :])
    cols = jnp.concatenate(slabs, axis=-1)
    return cols.reshape(b * ho * wo, 7 * 7 * c), ho, wo


# ------------------------------ Pallas kernels --------------------------------

def _conv0_kernel(x_ref, w_ref, s_ref, t_ref, o_ref):
    """conv0 (as matmul on im2col patches) -> norm0 affine -> relu0."""
    y = jnp.dot(x_ref[...].astype(jnp.bfloat16), w_ref[...],
                preferred_element_type=jnp.float32)
    o_ref[...] = jnp.maximum(y * s_ref[...] + t_ref[...], 0.0)


def conv0_norm_relu(cols, w_bf16, s, t):
    m, k = cols.shape
    n = w_bf16.shape[1]
    tm, m_pad = _row_tiling(m)
    cols_p = _pad_rows(cols, m_pad)
    out = pl.pallas_call(
        _conv0_kernel,
        grid=(m_pad // tm,),
        in_specs=[pl.BlockSpec((tm, k), lambda i: (i, 0)),
                  pl.BlockSpec((k, n), lambda i: (0, 0)),
                  pl.BlockSpec((1, n), lambda i: (0, 0)),
                  pl.BlockSpec((1, n), lambda i: (0, 0))],
        out_specs=pl.BlockSpec((tm, n), lambda i: (i, 0)),
        out_shape=jax.ShapeDtypeStruct((m_pad, n), jnp.float32),
        compiler_params=pltpu.CompilerParams(
            dimension_semantics=("parallel",),
            vmem_limit_bytes=_VMEM_LIMIT),
        cost_estimate=pl.CostEstimate(
            flops=2 * m_pad * k * n, transcendentals=0,
            bytes_accessed=4 * (m_pad * k + k * n + m_pad * n)),
    )(cols_p, w_bf16, s, t)
    return out[:m] if m_pad != m else out


def _max9_kernel(*refs):
    """Elementwise max of 9 shifted slabs (MaxPool2d(3, stride=2, padding=1))."""
    o_ref = refs[-1]
    acc = refs[0][...]
    for r in refs[1:-1]:
        acc = jnp.maximum(acc, r[...])
    o_ref[...] = acc


def maxpool_3x3_s2_p1(x):
    b, h, w, c = x.shape
    ho, wo = h // 2, w // 2
    xp = jnp.pad(x, ((0, 0), (1, 1), (1, 1), (0, 0)),
                 constant_values=float("-inf"))
    slabs = []
    for i in range(3):
        for j in range(3):
            slabs.append(xp[:, i:i + 2 * ho - 1:2, j:j + 2 * wo - 1:2, :]
                         .reshape(b * ho * wo, c))
    m = b * ho * wo
    tm, m_pad = _row_tiling(m)
    slabs = [_pad_rows(sl, m_pad) for sl in slabs]
    out = pl.pallas_call(
        _max9_kernel,
        grid=(m_pad // tm,),
        in_specs=[pl.BlockSpec((tm, c), lambda i: (i, 0)) for _ in range(9)],
        out_specs=pl.BlockSpec((tm, c), lambda i: (i, 0)),
        out_shape=jax.ShapeDtypeStruct((m_pad, c), jnp.float32),
        compiler_params=pltpu.CompilerParams(
            dimension_semantics=("parallel",),
            vmem_limit_bytes=_VMEM_LIMIT),
    )(*slabs)
    out = out[:m] if m_pad != m else out
    return out.reshape(b, ho, wo, c)


def _dense_layer_kernel(x_ref, s1_ref, t1_ref, w1_ref, s2_ref, t2_ref, w2_ref,
                        nfirst_ref, nlast_ref, o_ref, pad_ref, *, height, width):
    """One full DenseNet layer (per image):
       norm1 -> relu -> conv1(1x1) -> norm2 -> relu -> conv2(3x3, pad 1).
    The 3x3 conv is 9 shifted matmuls over a zero-padded, flattened copy of the
    bottleneck held in a VMEM scratch (no im2col in HBM)."""
    hw = height * width
    pad_top = _round_up(width + 1, 8)          # 8-aligned store offset
    base = pad_top - width - 1

    # ---- bottleneck: BN1 + ReLU + 1x1 conv + BN2 + ReLU (all in VMEM) ----
    h = jnp.maximum(x_ref[...] * s1_ref[...] + t1_ref[...], 0.0)
    bott = jnp.dot(h.astype(jnp.bfloat16), w1_ref[...],
                   preferred_element_type=jnp.float32)            # (HW, 128)
    bott = jnp.maximum(bott * s2_ref[...] + t2_ref[...], 0.0)

    # ---- zero-padded flat (row-major, width columns) copy of the bottleneck ----
    pad_ref[...] = jnp.zeros_like(pad_ref)
    pad_ref[pad_top:pad_top + hw, :] = bott

    # ---- 3x3 conv as 9 shifted matmuls, masking horizontal wrap-around ----
    acc = jnp.zeros((hw, GROWTH), jnp.float32)
    for di in range(3):
        for dj in range(3):
            off = base + di * width + dj
            win = pad_ref[off:off + hw, :]
            contrib = jnp.dot(win.astype(jnp.bfloat16), w2_ref[di * 3 + dj],
                              preferred_element_type=jnp.float32)
            if dj == 0:
                contrib = contrib * nfirst_ref[...]
            elif dj == 2:
                contrib = contrib * nlast_ref[...]
            acc = acc + contrib
    o_ref[...] = acc


def dense_layer(x, lp):
    b, h, w, cin = x.shape
    hw = h * w
    x2 = x.reshape(b, hw, cin)
    s1, t1 = lp["norm1"]
    s2, t2 = lp["norm2"]

    # column-validity masks for the horizontal taps (computed once, tiny)
    col = jnp.arange(hw, dtype=jnp.int32) % w
    not_first = (col != 0).astype(jnp.float32).reshape(hw, 1)
    not_last = (col != (w - 1)).astype(jnp.float32).reshape(hw, 1)

    pad_top = _round_up(w + 1, 8)
    pad_rows = pad_top + hw + w + 1

    new = pl.pallas_call(
        functools.partial(_dense_layer_kernel, height=h, width=w),
        grid=(b,),
        in_specs=[
            pl.BlockSpec((None, hw, cin), lambda i: (i, 0, 0)),
            pl.BlockSpec((1, cin), lambda i: (0, 0)),
            pl.BlockSpec((1, cin), lambda i: (0, 0)),
            pl.BlockSpec((cin, BOTTLENECK), lambda i: (0, 0)),
            pl.BlockSpec((1, BOTTLENECK), lambda i: (0, 0)),
            pl.BlockSpec((1, BOTTLENECK), lambda i: (0, 0)),
            pl.BlockSpec((9, BOTTLENECK, GROWTH), lambda i: (0, 0, 0)),
            pl.BlockSpec((hw, 1), lambda i: (0, 0)),
            pl.BlockSpec((hw, 1), lambda i: (0, 0)),
        ],
        out_specs=pl.BlockSpec((None, hw, GROWTH), lambda i: (i, 0, 0)),
        out_shape=jax.ShapeDtypeStruct((b, hw, GROWTH), jnp.float32),
        scratch_shapes=[pltpu.VMEM((pad_rows, BOTTLENECK), jnp.float32)],
        compiler_params=pltpu.CompilerParams(
            dimension_semantics=("parallel",),
            vmem_limit_bytes=_VMEM_LIMIT),
    )(x2, s1, t1, lp["conv1_w"], s2, t2, lp["conv2_w"], not_first, not_last)

    new = new.reshape(b, h, w, GROWTH)
    # torch.cat([prev_features, new_features], dim=1)
    # TODO(synk): in-place channel-slab write would remove this concat traffic.
    return jnp.concatenate([x, new], axis=-1)


def _transition_kernel(x00_ref, x01_ref, x10_ref, x11_ref, s_ref, t_ref,
                       w_ref, o_ref):
    """Transition: norm -> relu -> conv1x1 -> AvgPool2d(2,2).
    The avgpool commutes with the 1x1 conv, so pool first (4x less matmul)."""
    s = s_ref[...]
    t = t_ref[...]
    acc = jnp.maximum(x00_ref[...] * s + t, 0.0)
    acc = acc + jnp.maximum(x01_ref[...] * s + t, 0.0)
    acc = acc + jnp.maximum(x10_ref[...] * s + t, 0.0)
    acc = acc + jnp.maximum(x11_ref[...] * s + t, 0.0)
    o_ref[...] = jnp.dot((acc * 0.25).astype(jnp.bfloat16), w_ref[...],
                         preferred_element_type=jnp.float32)


def transition(x, tp):
    b, h, w, cin = x.shape
    ho, wo = h // 2, w // 2
    s, t = tp["norm"]
    w_mat = tp["conv_w"]
    cout = w_mat.shape[1]
    slabs = [x[:, di::2, dj::2, :][:, :ho, :wo, :].reshape(b * ho * wo, cin)
             for di in (0, 1) for dj in (0, 1)]
    m = b * ho * wo
    tm, m_pad = _row_tiling(m)
    slabs = [_pad_rows(sl, m_pad) for sl in slabs]
    out = pl.pallas_call(
        _transition_kernel,
        grid=(m_pad // tm,),
        in_specs=([pl.BlockSpec((tm, cin), lambda i: (i, 0)) for _ in range(4)]
                  + [pl.BlockSpec((1, cin), lambda i: (0, 0)),
                     pl.BlockSpec((1, cin), lambda i: (0, 0)),
                     pl.BlockSpec((cin, cout), lambda i: (0, 0))]),
        out_specs=pl.BlockSpec((tm, cout), lambda i: (i, 0)),
        out_shape=jax.ShapeDtypeStruct((m_pad, cout), jnp.float32),
        compiler_params=pltpu.CompilerParams(
            dimension_semantics=("parallel",),
            vmem_limit_bytes=_VMEM_LIMIT),
        cost_estimate=pl.CostEstimate(
            flops=2 * m_pad * cin * cout, transcendentals=0,
            bytes_accessed=4 * (4 * m_pad * cin + cin * cout + m_pad * cout)),
    )(*slabs, s, t, w_mat)
    out = out[:m] if m_pad != m else out
    return out.reshape(b, ho, wo, cout)


def _head_kernel(x_ref, s5_ref, t5_ref, w1_ref, b1_ref, sb_ref, tb_ref,
                 w2_ref, b2_ref, o_ref):
    """norm5 (no ReLU) -> AdaptiveAvgPool2d((1,1)) -> view -> ClassBlock."""
    y = x_ref[...] * s5_ref[...] + t5_ref[...]
    feat = jnp.mean(y, axis=1)                                     # (B, 1024)
    hd = jnp.dot(feat.astype(jnp.bfloat16), w1_ref[...],
                 preferred_element_type=jnp.float32) + b1_ref[...]
    hd = hd * sb_ref[...] + tb_ref[...]                            # BatchNorm1d
    # Dropout(0.5) is identity in eval mode.
    o_ref[...] = jnp.dot(hd.astype(jnp.bfloat16), w2_ref[...],
                         preferred_element_type=jnp.float32) + b2_ref[...]


def head_forward(x, norm5, cls):
    b, h, w, c = x.shape
    x2 = x.reshape(b, h * w, c)
    s5 = norm5[0].reshape(1, 1, c)
    t5 = norm5[1].reshape(1, 1, c)
    n = cls["w2"].shape[1]
    return pl.pallas_call(
        _head_kernel,
        out_shape=jax.ShapeDtypeStruct((b, n), jnp.float32),
        compiler_params=pltpu.CompilerParams(vmem_limit_bytes=_VMEM_LIMIT),
    )(x2, s5, t5, cls["w1"], cls["b1"], cls["s"], cls["t"],
      cls["w2"], cls["b2"])


# ------------------------------- parameters -----------------------------------

class ParamGen:
    def __init__(self, seed):
        self._key = jax.random.PRNGKey(seed)

    def _next(self):
        self._key, k = jax.random.split(self._key)
        return k

    def conv_w(self, fan_in, cout, shape=None):
        w = (jax.random.normal(self._next(), (fan_in, cout), jnp.float32)
             * jnp.sqrt(2.0 / fan_in))
        if shape is not None:
            w = w.reshape(shape)
        return w.astype(jnp.bfloat16)          # MXU operands are bf16

    def bn(self, c, eps=1e-5):
        gamma = 1.0 + 0.1 * jax.random.normal(self._next(), (c,), jnp.float32)
        beta = 0.1 * jax.random.normal(self._next(), (c,), jnp.float32)
        mean = 0.1 * jax.random.normal(self._next(), (c,), jnp.float32)
        var = jnp.abs(1.0 + 0.1 * jax.random.normal(self._next(), (c,), jnp.float32))
        scale = gamma / jnp.sqrt(var + eps)    # eval-mode BN folded into affine (f32)
        shift = beta - mean * scale
        return scale.reshape(1, c), shift.reshape(1, c)

    def linear(self, cin, cout):
        w = (jax.random.normal(self._next(), (cin, cout), jnp.float32)
             * jnp.sqrt(1.0 / cin)).astype(jnp.bfloat16)
        b = 0.01 * jax.random.normal(self._next(), (cout,), jnp.float32)
        return w, b.reshape(1, cout)


def init_params(class_num, linear_num=512, seed=0):
    pg = ParamGen(seed)
    p = {"conv0_w": pg.conv_w(7 * 7 * 3, NUM_INIT_FEATURES),
         "norm0": pg.bn(NUM_INIT_FEATURES)}
    ch = NUM_INIT_FEATURES
    blocks = []
    for bi, n_layers in enumerate(BLOCK_CONFIG):
        layers = []
        for _ in range(n_layers):
            layers.append(dict(
                norm1=pg.bn(ch),
                conv1_w=pg.conv_w(ch, BOTTLENECK),
                norm2=pg.bn(BOTTLENECK),
                conv2_w=pg.conv_w(3 * 3 * BOTTLENECK, GROWTH,
                                  shape=(9, BOTTLENECK, GROWTH)),
            ))
            ch += GROWTH
        trans = None
        if bi != len(BLOCK_CONFIG) - 1:
            trans = dict(norm=pg.bn(ch), conv_w=pg.conv_w(ch, ch // 2))
            ch = ch // 2
        blocks.append(dict(layers=layers, trans=trans))
    p["blocks"] = blocks
    p["norm5"] = pg.bn(ch)                     # ch == 1024
    w1, b1 = pg.linear(ch, linear_num)
    s, t = pg.bn(linear_num)
    w2, b2 = pg.linear(linear_num, class_num)
    p["classifier"] = dict(w1=w1, b1=b1, s=s, t=t, w2=w2, b2=b2)
    return p


# ------------------------------- forward pass ----------------------------------

def ft_net_dense_forward(x_nchw, p):
    x = jnp.transpose(x_nchw, (0, 2, 3, 1)).astype(jnp.float32)   # NCHW -> NHWC
    b = x.shape[0]

    # conv0 (7x7, s2, p3, no bias) -> norm0 -> relu0  (M-tiled fused matmul)
    cols, ho, wo = _im2col_7x7(x, 2, 3)
    s0, t0 = p["norm0"]
    y = conv0_norm_relu(cols, p["conv0_w"], s0, t0)
    x = y.reshape(b, ho, wo, NUM_INIT_FEATURES)

    # pool0: MaxPool2d(3, stride=2, padding=1)
    x = maxpool_3x3_s2_p1(x)

    # dense blocks + transitions
    for blk in p["blocks"]:
        for lp in blk["layers"]:
            x = dense_layer(x, lp)
        if blk["trans"] is not None:
            x = transition(x, blk["trans"])

    # norm5 (no ReLU) + AdaptiveAvgPool2d((1,1)) + view(B,1024) + ClassBlock
    return head_forward(x, p["norm5"], p["classifier"])


# ----------------------------------- main ---------------------------------------

if __name__ == "__main__":
    CLASS_NUM = 10
    key = jax.random.PRNGKey(0)
    # Small input consistent with DenseNet-121: 3 channels, spatial multiple of 32.
    x = jax.random.normal(key, (2, 3, 64, 64), jnp.float32)        # NCHW like PyTorch

    params = init_params(CLASS_NUM, linear_num=512, seed=0)
    logits = ft_net_dense_forward(x, params)
    logits = jax.block_until_ready(logits)

    assert logits.shape == (2, CLASS_NUM), logits.shape
    assert bool(jnp.all(jnp.isfinite(logits)))
    print("KERNEL_OK")
</pallas_src>

<mosaic_0001>
module attributes {stable_mosaic.version = 11 : i64} {
  func.func @_conv0_kernel(%arg0: i32, %arg1: memref<512x147xf32, #tpu.memory_space<vmem>>, %arg2: memref<147x64xbf16, #tpu.memory_space<vmem>>, %arg3: memref<1x64xf32, #tpu.memory_space<vmem>>, %arg4: memref<1x64xf32, #tpu.memory_space<vmem>>, %arg5: memref<512x64xf32, #tpu.memory_space<vmem>>) attributes {dimension_semantics = [#tpu.dimension_semantics<parallel>], iteration_bounds = array<i64: 4>, scalar_prefetch = 0 : i64, scratch_operands = 0 : i64, tpu.core_type = #tpu.core_type<tc>, window_params = [{transform_indices = @transform_0, window_bounds = array<i64: 512, 147>}, {pipeline_mode = #tpu.pipeline_mode<synchronous>, transform_indices = @transform_1, window_bounds = array<i64: 147, 64>}, {pipeline_mode = #tpu.pipeline_mode<synchronous>, transform_indices = @transform_2, window_bounds = array<i64: 1, 64>}, {pipeline_mode = #tpu.pipeline_mode<synchronous>, transform_indices = @transform_3, window_bounds = array<i64: 1, 64>}, {transform_indices = @transform_4, window_bounds = array<i64: 512, 64>}]} {
    %c0 = arith.constant 0 : index
    %c0_0 = arith.constant 0 : index
    %0 = vector.load %arg1[%c0, %c0_0] : memref<512x147xf32, #tpu.memory_space<vmem>>, vector<512x147xf32>
    %1 = arith.truncf %0 : vector<512x147xf32> to vector<512x147xbf16>
    %c0_1 = arith.constant 0 : index
    %c0_2 = arith.constant 0 : index
    %2 = vector.load %arg2[%c0_1, %c0_2] : memref<147x64xbf16, #tpu.memory_space<vmem>>, vector<147x64xbf16>
    %cst = arith.constant dense<0.000000e+00> : vector<512x64xf32>
    %3 = tpu.matmul %1, %2, %cst {dimension_numbers = #tpu.dot_dimension_numbers<[1], [0], [0], [1], [0, 0, 1, 1], [], []>} : vector<512x147xbf16>, vector<147x64xbf16>, vector<512x64xf32> -> vector<512x64xf32>
    %c0_3 = arith.constant 0 : index
    %c0_4 = arith.constant 0 : index
    %4 = vector.load %arg3[%c0_3, %c0_4] : memref<1x64xf32, #tpu.memory_space<vmem>>, vector<1x64xf32>
    %5 = vector.broadcast %4 : vector<1x64xf32> to vector<512x64xf32>
    %6 = arith.mulf %3, %5 : vector<512x64xf32>
    %c0_5 = arith.constant 0 : index
    %c0_6 = arith.constant 0 : index
    %7 = vector.load %arg4[%c0_5, %c0_6] : memref<1x64xf32, #tpu.memory_space<vmem>>, vector<1x64xf32>
    %8 = vector.broadcast %7 : vector<1x64xf32> to vector<512x64xf32>
    %9 = arith.addf %6, %8 : vector<512x64xf32>
    %cst_7 = arith.constant 0.000000e+00 : f32
    %10 = vector.broadcast %cst_7 : f32 to vector<512x64xf32>
    %11 = arith.maximumf %9, %10 : vector<512x64xf32>
    %c0_8 = arith.constant 0 : index
    %c0_9 = arith.constant 0 : index
    %12 = vector.load %arg5[%c0_8, %c0_9] : memref<512x64xf32, #tpu.memory_space<vmem>>, vector<512x64xf32>
    tpu.vector_store %arg5[%c0_8, %c0_9], %11 {strides = array<i32>} : memref<512x64xf32, #tpu.memory_space<vmem>>, vector<512x64xf32>,
    return
  }
  func.func @transform_0(%arg0: i32) -> (i32, i32) {
    %c0_i32 = arith.constant 0 : i32
    %c0_i32_0 = arith.constant 0 : i32
    return %arg0, %c0_i32 : i32, i32
  }
  func.func @transform_1(%arg0: i32) -> (i32, i32) {
    %c0_i32 = arith.constant 0 : i32
    %c0_i32_0 = arith.constant 0 : i32
    %c0_i32_1 = arith.constant 0 : i32
    return %c0_i32, %c0_i32_0 : i32, i32
  }
  func.func @transform_2(%arg0: i32) -> (i32, i32) {
    %c0_i32 = arith.constant 0 : i32
    %c0_i32_0 = arith.constant 0 : i32
    %c0_i32_1 = arith.constant 0 : i32
    return %c0_i32, %c0_i32_0 : i32, i32
  }
  func.func @transform_3(%arg0: i32) -> (i32, i32) {
    %c0_i32 = arith.constant 0 : i32
    %c0_i32_0 = arith.constant 0 : i32
    %c0_i32_1 = arith.constant 0 : i32
    return %c0_i32, %c0_i32_0 : i32, i32
  }
  func.func @transform_4(%arg0: i32) -> (i32, i32) {
    %c0_i32 = arith.constant 0 : i32
    %c0_i32_0 = arith.constant 0 : i32
    return %arg0, %c0_i32 : i32, i32
  }
}

</mosaic_0001>

<llo_original>
// kernel: tpu_custom_call.1
$region0: #{tpu_custom_call.1}
  #allocation0 [shape = 'u32[]', space=smem, size = 0x4, offset = 0x4, fixed_abs, tag = 'smem constant byte address 0x4 - core index']
  #allocation1 [shape = 'u32[72,128]{1,0:T(1,128)}', space=vmem, size = 0x9000, scoped, tag = 'internal scratch']
  %s0 = inlined_call_operand.vmem [shape: f32[2048,147], index: 0, kind: input, shape index: {}]
  %s1 = inlined_call_operand.vmem [shape: bf16[147,64], index: 1, kind: input, shape index: {}]
  %s2 = inlined_call_operand.vmem [shape: f32[1,64], index: 2, kind: input, shape index: {}]
  %s3 = inlined_call_operand.vmem [shape: f32[1,64], index: 3, kind: input, shape index: {}]
  %s4 = inlined_call_operand.vmem [shape: f32[2048,64], index: 4, kind: output, shape index: {}]
  %s5 = sld [smem:[#allocation0]]
  $region49: #{tpu_custom_call.1} parent=0
    _
  %s7 = ssub.s32 1, %s5
  %s8 = scalar_select 0, %s7, %s5
  loop: start=0, step=1, limit=6
  $region2: #{tpu_custom_call.1} parent=0 // loop_pre_header
    _
  $region3: #{tpu_custom_call.1} parent=0 // loop_header
    %s10 = sphi 0, %s14
    %p11 = scmp.ge.s32.totalorder %s10, 6
    %s20 = sphi 0, %s22
    %s23 = sphi 0, %s20
    %s24 = sphi 0, %s23
    %s40 = sphi 0, %s24
    %s44 = sphi 0, %s44
    %s46 = sphi 0, %s44
    %s47 = sphi 0, %s46
    %s61 = sphi 0, %s47
    %s65 = sphi 0, %s65
    %s67 = sphi 0, %s65
    %s68 = sphi 0, %s67
    %s82 = sphi 0, %s68
    %s86 = sphi 0, %s86
    %s88 = sphi 0, %s86
    %s89 = sphi 0, %s88
    %s103 = sphi 0, %s89
    %s109 = sphi 0, %s111
    %s112 = sphi 0, %s109
    %s113 = sphi 0, %s112
    %s129 = sphi 0, %s113
  $region4: #{tpu_custom_call.1} parent=0 // loop_header_branch
    %13 = sbr.rel (%p11) target = $region8
  $region5: #{tpu_custom_call.1} parent=0 // loop_body
    %s15 = ssub.s32 %s10, 1
    %s16 = ssub.s32 %s10, 2
    %s17 = sadd.s32 %s10, 1
    %s18 = ssub.s32 %s10, %s17
    %p19 = scmp.eq.s32.totalorder %s18, 0
    %s21 = sadd.s32 %s20, 1
    %s22 = scalar_select %p19, %s20, %s21
    %p25 = pneg %p19
    %p26 = scmp.eq.s32.totalorder %s10, 3
    %p27 = por %p25, %p26
    %p28 = scmp.ne.s32.totalorder %s20, %s23
    %p29 = scmp.eq.s32.totalorder %s10, 0
    %p30 = por %p28, %p29
    %p31 = scmp.ne.s32.totalorder %s20, %s23
    %p32 = scmp.eq.s32.totalorder %s15, 3
    %p33 = por %p31, %p32
    %p34 = scmp.ne.s32.totalorder %s23, %s24
    %p35 = scmp.eq.s32.totalorder %s15, 0
    %p36 = por %p34, %p35
    %p37 = scmp.ne.s32.totalorder %s23, %s24
    %p38 = scmp.eq.s32.totalorder %s16, 3
    %p39 = por %p37, %p38
    %p41 = scmp.ne.s32.totalorder %s24, %s40
    %p42 = scmp.eq.s32.totalorder %s16, 0
    %p43 = por %p41, %p42
    %s45 = sadd.s32 %s44, 1
    %p48 = scmp.eq.s32.totalorder %s10, 3
    %p49 = scmp.ne.s32.totalorder %s44, %s46
    %p50 = scmp.eq.s32.totalorder %s10, 0
    %p51 = por %p49, %p50
    %p52 = scmp.ne.s32.totalorder %s44, %s46
    %p53 = scmp.eq.s32.totalorder %s15, 3
    %p54 = por %p52, %p53
    %p55 = scmp.ne.s32.totalorder %s46, %s47
    %p56 = scmp.eq.s32.totalorder %s15, 0
    %p57 = por %p55, %p56
    %p58 = scmp.ne.s32.totalorder %s46, %s47
    %p59 = scmp.eq.s32.totalorder %s16, 3
    %p60 = por %p58, %p59
    %p62 = scmp.ne.s32.totalorder %s47, %s61
    %p63 = scmp.eq.s32.totalorder %s16, 0
    %p64 = por %p62, %p63
    %s66 = sadd.s32 %s65, 1
    %p69 = scmp.eq.s32.totalorder %s10, 3
    %p70 = scmp.ne.s32.totalorder %s65, %s67
    %p71 = scmp.eq.s32.totalorder %s10, 0
    %p72 = por %p70, %p71
    %p73 = scmp.ne.s32.totalorder %s65, %s67
    %p74 = scmp.eq.s32.totalorder %s15, 3
    %p75 = por %p73, %p74
    %p76 = scmp.ne.s32.totalorder %s67, %s68
    %p77 = scmp.eq.s32.totalorder %s15, 0
    %p78 = por %p76, %p77
    %p79 = scmp.ne.s32.totalorder %s67, %s68
    %p80 = scmp.eq.s32.totalorder %s16, 3
    %p81 = por %p79, %p80
    %p83 = scmp.ne.s32.totalorder %s68, %s82
    %p84 = scmp.eq.s32.totalorder %s16, 0
    %p85 = por %p83, %p84
    %s87 = sadd.s32 %s86, 1
    %p90 = scmp.eq.s32.totalorder %s10, 3
    %p91 = scmp.ne.s32.totalorder %s86, %s88
    %p92 = scmp.eq.s32.totalorder %s10, 0
    %p93 = por %p91, %p92
    %p94 = scmp.ne.s32.totalorder %s86, %s88
    %p95 = scmp.eq.s32.totalorder %s15, 3
    %p96 = por %p94, %p95
    %p97 = scmp.ne.s32.totalorder %s88, %s89
    %p98 = scmp.eq.s32.totalorder %s15, 0
    %p99 = por %p97, %p98
    %p100 = scmp.ne.s32.totalorder %s88, %s89
    %p101 = scmp.eq.s32.totalorder %s16, 3
    %p102 = por %p100, %p101
    %p104 = scmp.ne.s32.totalorder %s89, %s103
    %p105 = scmp.eq.s32.totalorder %s16, 0
    %p106 = por %p104, %p105
    %s107 = ssub.s32 %s10, %s17
    %p108 = scmp.eq.s32.totalorder %s107, 0
    %s110 = sadd.s32 %s109, 1
    %s111 = scalar_select %p108, %s109, %s110
    %p114 = pneg %p108
    %p115 = scmp.eq.s32.totalorder %s10, 3
    %p116 = por %p114, %p115
    %p117 = scmp.ne.s32.totalorder %s109, %s112
    %p118 = scmp.eq.s32.totalorder %s10, 0
    %p119 = por %p117, %p118
    %p120 = scmp.ne.s32.totalorder %s109, %s112
    %p121 = scmp.eq.s32.totalorder %s15, 3
    %p122 = por %p120, %p121
    %p123 = scmp.ne.s32.totalorder %s112, %s113
    %p124 = scmp.eq.s32.totalorder %s15, 0
    %p125 = por %p123, %p124
    %p126 = scmp.ne.s32.totalorder %s112, %s113
    %p127 = scmp.eq.s32.totalorder %s16, 3
    %p128 = por %p126, %p127
    %p130 = scmp.ne.s32.totalorder %s113, %s129
    %p131 = scmp.eq.s32.totalorder %s16, 0
    %p132 = por %p130, %p131
    %p133 = scmp.le.s32.totalorder 1, %s10
    %p134 = scmp.lt.s32.totalorder %s10, 5
    %p135 = pnand %p133, %p134
    %p136 = pneg %p135
    // Predicated region
    $region9: #{tpu_custom_call.1} parent=5 // pred_check
      _
    $region10: #{tpu_custom_call.1} parent=5 // pred_check_branch
      %138 = sbr.rel (%p135) target = $region12
    $region11: #{tpu_custom_call.1} parent=5 // pred_region
      %s139 = ssub.s32 %s10, 1
      // Predicated region
      $region13: #{tpu_custom_call.1} parent=11 // pred_check
        %p140 = pneg %p57
      $region14: #{tpu_custom_call.1} parent=11 // pred_check_branch
        %142 = sbr.rel (%p140) target = $region16
      $region15: #{tpu_custom_call.1} parent=11 // pred_region
        _
      $region16: #{tpu_custom_call.1} parent=11 // pred_fallthru
        _
      // Predicated region
      $region17: #{tpu_custom_call.1} parent=11 // pred_check
        %p143 = pneg %p78
      $region18: #{tpu_custom_call.1} parent=11 // pred_check_branch
        %145 = sbr.rel (%p143) target = $region20
      $region19: #{tpu_custom_call.1} parent=11 // pred_region
        _
      $region20: #{tpu_custom_call.1} parent=11 // pred_fallthru
        _
      // Predicated region
      $region21: #{tpu_custom_call.1} parent=11 // pred_check
        %p146 = pneg %p99
      $region22: #{tpu_custom_call.1} parent=11 // pred_check_branch
        %148 = sbr.rel (%p146) target = $region24
      $region23: #{tpu_custom_call.1} parent=11 // pred_region
        _
      $region24: #{tpu_custom_call.1} parent=11 // pred_fallthru
        _
    $region12: #{tpu_custom_call.1} parent=5 // pred_fallthru
      _
    %p149 = scmp.lt.s32.totalorder %s10, 4
    // Predicated region
    $region25: #{tpu_custom_call.1} parent=5 // pred_check
      %p150 = pneg %p149
    $region26: #{tpu_custom_call.1} parent=5 // pred_check_branch
      %152 = sbr.rel (%p150) target = $region28
    $region27: #{tpu_custom_call.1} parent=5 // pred_region
      // Predicated region
      $region29: #{tpu_custom_call.1} parent=27 // pred_check
        %p153 = pneg %p30
      $region30: #{tpu_custom_call.1} parent=27 // pred_check_branch
        %155 = sbr.rel (%p153) target = $region32
      $region31: #{tpu_custom_call.1} parent=27 // pred_region
        %s156 = smul.u32 64, %s10
        %p157 = scmp.lt.s32.totalorder %s156, 255
        %s158 = scalar_select %p157, %s156, 255
        %s159 = smul.addr %s158, 2
        %s160 = smul.addr %s159, 8
        %s161 = scalar_lea.vmem %s0, %s160
        %s162 = smul.u32 64, %s10
      $region32: #{tpu_custom_call.1} parent=27 // pred_fallthru
        _
    $region28: #{tpu_custom_call.1} parent=5 // pred_fallthru
      _
    %p163 = scmp.le.s32.totalorder 1, %s10
    %p164 = scmp.lt.s32.totalorder %s10, 5
    %p165 = pnand %p163, %p164
    %p166 = pneg %p165
    // Predicated region
    $region33: #{tpu_custom_call.1} parent=5 // pred_check
      _
    $region34: #{tpu_custom_call.1} parent=5 // pred_check_branch
      %168 = sbr.rel (%p165) target = $region36
    $region35: #{tpu_custom_call.1} parent=5 // pred_region
      %s169 = ssub.s32 %s10, 1
      %s170 = smul.u32 64, %s15
      %p171 = scmp.lt.s32.totalorder %s170, 255
      %s172 = scalar_select %p171, %s170, 255
      %s173 = smul.addr %s172, 2
      %s174 = smul.addr %s173, 8
      %s175 = scalar_lea.vmem %s0, %s174
      %p176 = pneg %p36
      %p177 = pneg %p33
      %p178 = pneg %p57
      %p179 = pneg %p54
      %p180 = pneg %p78
      %p181 = pneg %p75
      %p182 = pneg %p99
      %p183 = pneg %p96
      %p184 = pneg %p125
      %p185 = pneg %p122
      %s186 = smul.u32 64, %s15
      %p187 = scmp.lt.s32.totalorder %s186, 255
      %s188 = scalar_select %p187, %s186, 255
      %s189 = smul.addr %s188, 8
      %s190 = scalar_lea.vmem %s4, %s189
      %s191 = smul.u32 64, %s15
      %p192 = scmp.lt.s32.totalorder %s191, 255
      %s193 = scalar_select %p192, %s191, 255
      %s194 = smul.addr %s193, 2
      %s195 = smul.addr %s194, 8
      %s196 = scalar_lea.vmem %s0, %s195
      %s197 = smul.u32 64, %s15
      %s198 = smul.u32 64, %s15
      %p199 = scmp.lt.s32.totalorder %s198, 255
      %s200 = scalar_select %p199, %s198, 255
      %s201 = smul.addr %s200, 8
      %s202 = scalar_lea.vmem %s4, %s201
      %s203 = smul.u32 64, %s15
      %v205 = vld [vmem:[%s196] sm:$0xff]
      %v206 = vld [vmem:[%s196 + $0x8] sm:$0xff]
      %v207 = vld [vmem:[%s196 + $0x10] sm:$0xff]
      %v208 = vld [vmem:[%s196 + $0x18] sm:$0xff]
      %v209 = vld [vmem:[%s196 + $0x20] sm:$0xff]
      %v210 = vld [vmem:[%s196 + $0x28] sm:$0xff]
      %v211 = vld [vmem:[%s196 + $0x30] sm:$0xff]
      %v212 = vld [vmem:[%s196 + $0x38] sm:$0xff]
      %v213 = vld [vmem:[%s196 + $0x40] sm:$0xff]
      %v214 = vld [vmem:[%s196 + $0x48] sm:$0xff]
      %v215 = vld [vmem:[%s196 + $0x50] sm:$0xff]
      %v216 = vld [vmem:[%s196 + $0x58] sm:$0xff]
      %v217 = vld [vmem:[%s196 + $0x60] sm:$0xff]
      %v218 = vld [vmem:[%s196 + $0x68] sm:$0xff]
      %v219 = vld [vmem:[%s196 + $0x70] sm:$0xff]
      %v220 = vld [vmem:[%s196 + $0x78] sm:$0xff]
      %v221 = vld [vmem:[%s196 + $0x80] sm:$0xff]
      %v222 = vld [vmem:[%s196 + $0x88] sm:$0xff]
      %v223 = vld [vmem:[%s196 + $0x90] sm:$0xff]
      %v224 = vld [vmem:[%s196 + $0x98] sm:$0xff]
      %v225 = vld [vmem:[%s196 + $0xa0] sm:$0xff]
      %v226 = vld [vmem:[%s196 + $0xa8] sm:$0xff]
      %v227 = vld [vmem:[%s196 + $0xb0] sm:$0xff]
      %v228 = vld [vmem:[%s196 + $0xb8] sm:$0xff]
      %v229 = vld [vmem:[%s196 + $0xc0] sm:$0xff]
      %v230 = vld [vmem:[%s196 + $0xc8] sm:$0xff]
      %v231 = vld [vmem:[%s196 + $0xd0] sm:$0xff]
      %v232 = vld [vmem:[%s196 + $0xd8] sm:$0xff]
      %v233 = vld [vmem:[%s196 + $0xe0] sm:$0xff]
      %v234 = vld [vmem:[%s196 + $0xe8] sm:$0xff]
      %v235 = vld [vmem:[%s196 + $0xf0] sm:$0xff]
      %v236 = vld [vmem:[%s196 + $0xf8] sm:$0xff]
      %v237 = vld [vmem:[%s196 + $0x100] sm:$0xff]
      %v238 = vld [vmem:[%s196 + $0x108] sm:$0xff]
      %v239 = vld [vmem:[%s196 + $0x110] sm:$0xff]
      %v240 = vld [vmem:[%s196 + $0x118] sm:$0xff]
      %v241 = vld [vmem:[%s196 + $0x120] sm:$0xff]
      %v242 = vld [vmem:[%s196 + $0x128] sm:$0xff]
      %v243 = vld [vmem:[%s196 + $0x130] sm:$0xff]
      %v244 = vld [vmem:[%s196 + $0x138] sm:$0xff]
      %v245 = vld [vmem:[%s196 + $0x140] sm:$0xff]
      %v246 = vld [vmem:[%s196 + $0x148] sm:$0xff]
      %v247 = vld [vmem:[%s196 + $0x150] sm:$0xff]
      %v248 = vld [vmem:[%s196 + $0x158] sm:$0xff]
      %v249 = vld [vmem:[%s196 + $0x160] sm:$0xff]
      %v250 = vld [vmem:[%s196 + $0x168] sm:$0xff]
      %v251 = vld [vmem:[%s196 + $0x170] sm:$0xff]
      %v252 = vld [vmem:[%s196 + $0x178] sm:$0xff]
      %v253 = vld [vmem:[%s196 + $0x180] sm:$0xff]
      %v254 = vld [vmem:[%s196 + $0x188] sm:$0xff]
      %v255 = vld [vmem:[%s196 + $0x190] sm:$0xff]
      %v256 = vld [vmem:[%s196 + $0x198] sm:$0xff]
      %v257 = vld [vmem:[%s196 + $0x1a0] sm:$0xff]
      %v258 = vld [vmem:[%s196 + $0x1a8] sm:$0xff]
      %v259 = vld [vmem:[%s196 + $0x1b0] sm:$0xff]
      %v260 = vld [vmem:[%s196 + $0x1b8] sm:$0xff]
      %v261 = vld [vmem:[%s196 + $0x1c0] sm:$0xff]
      %v262 = vld [vmem:[%s196 + $0x1c8] sm:$0xff]
      %v263 = vld [vmem:[%s196 + $0x1d0] sm:$0xff]
      %v264 = vld [vmem:[%s196 + $0x1d8] sm:$0xff]
      %v265 = vld [vmem:[%s196 + $0x1e0] sm:$0xff]
      %v266 = vld [vmem:[%s196 + $0x1e8] sm:$0xff]
      %v267 = vld [vmem:[%s196 + $0x1f0] sm:$0xff]
      %v268 = vld [vmem:[%s196 + $0x1f8] sm:$0xff]
      %v269 = vld [vmem:[%s196 + $0x200] sm:$0xff]
      %v270 = vld [vmem:[%s196 + $0x208] sm:$0xff]
      %v271 = vld [vmem:[%s196 + $0x210] sm:$0xff]
      %v272 = vld [vmem:[%s196 + $0x218] sm:$0xff]
      %v273 = vld [vmem:[%s196 + $0x220] sm:$0xff]
      %v274 = vld [vmem:[%s196 + $0x228] sm:$0xff]
      %v275 = vld [vmem:[%s196 + $0x230] sm:$0xff]
      %v276 = vld [vmem:[%s196 + $0x238] sm:$0xff]
      %v277 = vld [vmem:[%s196 + $0x240] sm:$0xff]
      %v278 = vld [vmem:[%s196 + $0x248] sm:$0xff]
      %v279 = vld [vmem:[%s196 + $0x250] sm:$0xff]
      %v280 = vld [vmem:[%s196 + $0x258] sm:$0xff]
      %v281 = vld [vmem:[%s196 + $0x260] sm:$0xff]
      %v282 = vld [vmem:[%s196 + $0x268] sm:$0xff]
      %v283 = vld [vmem:[%s196 + $0x270] sm:$0xff]
      %v284 = vld [vmem:[%s196 + $0x278] sm:$0xff]
      %v285 = vld [vmem:[%s196 + $0x280] sm:$0xff]
      %v286 = vld [vmem:[%s196 + $0x288] sm:$0xff]
      %v287 = vld [vmem:[%s196 + $0x290] sm:$0xff]
      %v288 = vld [vmem:[%s196 + $0x298] sm:$0xff]
      %v289 = vld [vmem:[%s196 + $0x2a0] sm:$0xff]
      %v290 = vld [vmem:[%s196 + $0x2a8] sm:$0xff]
      %v291 = vld [vmem:[%s196 + $0x2b0] sm:$0xff]
      %v292 = vld [vmem:[%s196 + $0x2b8] sm:$0xff]
      %v293 = vld [vmem:[%s196 + $0x2c0] sm:$0xff]
      %v294 = vld [vmem:[%s196 + $0x2c8] sm:$0xff]
      %v295 = vld [vmem:[%s196 + $0x2d0] sm:$0xff]
      %v296 = vld [vmem:[%s196 + $0x2d8] sm:$0xff]
      %v297 = vld [vmem:[%s196 + $0x2e0] sm:$0xff]
      %v298 = vld [vmem:[%s196 + $0x2e8] sm:$0xff]
      %v299 = vld [vmem:[%s196 + $0x2f0] sm:$0xff]
      %v300 = vld [vmem:[%s196 + $0x2f8] sm:$0xff]
      %v301 = vld [vmem:[%s196 + $0x300] sm:$0xff]
      %v302 = vld [vmem:[%s196 + $0x308] sm:$0xff]
      %v303 = vld [vmem:[%s196 + $0x310] sm:$0xff]
      %v304 = vld [vmem:[%s196 + $0x318] sm:$0xff]
      %v305 = vld [vmem:[%s196 + $0x320] sm:$0xff]
      %v306 = vld [vmem:[%s196 + $0x328] sm:$0xff]
      %v307 = vld [vmem:[%s196 + $0x330] sm:$0xff]
      %v308 = vld [vmem:[%s196 + $0x338] sm:$0xff]
      %v309 = vld [vmem:[%s196 + $0x340] sm:$0xff]
      %v310 = vld [vmem:[%s196 + $0x348] sm:$0xff]
      %v311 = vld [vmem:[%s196 + $0x350] sm:$0xff]
      %v312 = vld [vmem:[%s196 + $0x358] sm:$0xff]
      %v313 = vld [vmem:[%s196 + $0x360] sm:$0xff]
      %v314 = vld [vmem:[%s196 + $0x368] sm:$0xff]
      %v315 = vld [vmem:[%s196 + $0x370] sm:$0xff]
      %v316 = vld [vmem:[%s196 + $0x378] sm:$0xff]
      %v317 = vld [vmem:[%s196 + $0x380] sm:$0xff]
      %v318 = vld [vmem:[%s196 + $0x388] sm:$0xff]
      %v319 = vld [vmem:[%s196 + $0x390] sm:$0xff]
      %v320 = vld [vmem:[%s196 + $0x398] sm:$0xff]
      %v321 = vld [vmem:[%s196 + $0x3a0] sm:$0xff]
      %v322 = vld [vmem:[%s196 + $0x3a8] sm:$0xff]
      %v323 = vld [vmem:[%s196 + $0x3b0] sm:$0xff]
      %v324 = vld [vmem:[%s196 + $0x3b8] sm:$0xff]
      %v325 = vld [vmem:[%s196 + $0x3c0] sm:$0xff]
      %v326 = vld [vmem:[%s196 + $0x3c8] sm:$0xff]
      %v327 = vld [vmem:[%s196 + $0x3d0] sm:$0xff]
      %v328 = vld [vmem:[%s196 + $0x3d8] sm:$0xff]
      %v329 = vld [vmem:[%s196 + $0x3e0] sm:$0xff]
      %v330 = vld [vmem:[%s196 + $0x3e8] sm:$0xff]
      %v331 = vld [vmem:[%s196 + $0x3f0] sm:$0xff]
      %v332 = vld [vmem:[%s196 + $0x3f8] sm:$0xff]
      %v333 = vpack.c.bf16 %v207, %v205
      %v334 = vpack.c.bf16 %v208, %v206
      %v335 = vpack.c.bf16 %v211, %v209
      %v336 = vpack.c.bf16 %v212, %v210
      %v337 = vpack.c.bf16 %v215, %v213
      %v338 = vpack.c.bf16 %v216, %v214
      %v339 = vpack.c.bf16 %v219, %v217
      %v340 = vpack.c.bf16 %v220, %v218
      %v341 = vpack.c.bf16 %v223, %v221
      %v342 = vpack.c.bf16 %v224, %v222
      %v343 = vpack.c.bf16 %v227, %v225
      %v344 = vpack.c.bf16 %v228, %v226
      %v345 = vpack.c.bf16 %v231, %v229
      %v346 = vpack.c.bf16 %v232, %v230
      %v347 = vpack.c.bf16 %v235, %v233
      %v348 = vpack.c.bf16 %v236, %v234
      %v349 = vpack.c.bf16 %v239, %v237
      %v350 = vpack.c.bf16 %v240, %v238
      %v351 = vpack.c.bf16 %v243, %v241
      %v352 = vpack.c.bf16 %v244, %v242
      %v353 = vpack.c.bf16 %v247, %v245
      %v354 = vpack.c.bf16 %v248, %v246
      %v355 = vpack.c.bf16 %v251, %v249
      %v356 = vpack.c.bf16 %v252, %v250
      %v357 = vpack.c.bf16 %v255, %v253
      %v358 = vpack.c.bf16 %v256, %v254
      %v359 = vpack.c.bf16 %v259, %v257
      %v360 = vpack.c.bf16 %v260, %v258
      %v361 = vpack.c.bf16 %v263, %v261
      %v362 = vpack.c.bf16 %v264, %v262
      %v363 = vpack.c.bf16 %v267, %v265
      %v364 = vpack.c.bf16 %v268, %v266
      %v365 = vpack.c.bf16 %v271, %v269
      %v366 = vpack.c.bf16 %v272, %v270
      %v367 = vpack.c.bf16 %v275, %v273
      %v368 = vpack.c.bf16 %v276, %v274
      %v369 = vpack.c.bf16 %v279, %v277
      %v370 = vpack.c.bf16 %v280, %v278
      %v371 = vpack.c.bf16 %v283, %v281
      %v372 = vpack.c.bf16 %v284, %v282
      %v373 = vpack.c.bf16 %v287, %v285
      %v374 = vpack.c.bf16 %v288, %v286
      %v375 = vpack.c.bf16 %v291, %v289
      %v376 = vpack.c.bf16 %v292, %v290
      %v377 = vpack.c.bf16 %v295, %v293
      %v378 = vpack.c.bf16 %v296, %v294
      %v379 = vpack.c.bf16 %v299, %v297
      %v380 = vpack.c.bf16 %v300, %v298
      %v381 = vpack.c.bf16 %v303, %v301
      %v382 = vpack.c.bf16 %v304, %v302
      %v383 = vpack.c.bf16 %v307, %v305
      %v384 = vpack.c.bf16 %v308, %v306
      %v385 = vpack.c.bf16 %v311, %v309
      %v386 = vpack.c.bf16 %v312, %v310
      %v387 = vpack.c.bf16 %v315, %v313
      %v388 = vpack.c.bf16 %v316, %v314
      %v389 = vpack.c.bf16 %v319, %v317
      %v390 = vpack.c.bf16 %v320, %v318
      %v391 = vpack.c.bf16 %v323, %v321
      %v392 = vpack.c.bf16 %v324, %v322
      %v393 = vpack.c.bf16 %v327, %v325
      %v394 = vpack.c.bf16 %v328, %v326
      %v395 = vpack.c.bf16 %v331, %v329
      %v396 = vpack.c.bf16 %v332, %v330
      %v397 = vld [vmem:[%s1] sm:$0xf]
      %v398 = vld [vmem:[%s1 + $0x4] sm:$0xf]
      %v399 = vld [vmem:[%s1 + $0x8] sm:$0xf]
      %v400 = vld [vmem:[%s1 + $0xc] sm:$0xf]
      %v401 = vld [vmem:[%s1 + $0x10] sm:$0xf]
      %v402 = vld [vmem:[%s1 + $0x14] sm:$0xf]
      %v403 = vld [vmem:[%s1 + $0x18] sm:$0xf]
      %v404 = vld [vmem:[%s1 + $0x1c] sm:$0xf]
      %v405 = vld [vmem:[%s1 + $0x20] sm:$0xf]
      %v406 = vld [vmem:[%s1 + $0x24] sm:$0xf]
      %v407 = vld [vmem:[%s1 + $0x28] sm:$0xf]
      %v408 = vld [vmem:[%s1 + $0x2c] sm:$0xf]
      %v409 = vld [vmem:[%s1 + $0x30] sm:$0xf]
      %v410 = vld [vmem:[%s1 + $0x34] sm:$0xf]
      %v411 = vld [vmem:[%s1 + $0x38] sm:$0xf]
      %v412 = vld [vmem:[%s1 + $0x3c] sm:$0xf]
      %v413 = vld [vmem:[%s1 + $0x40] sm:$0xf]
      %v414 = vld [vmem:[%s1 + $0x44] sm:$0xf]
      %v415 = vld [vmem:[%s1 + $0x48] sm:$0x3]
      %v435 = vunpack.c.l.b16 %v397
      %v436 = vunpack.c.l.b16 %v398
      %v437 = vunpack.c.l.b16 %v399
      %v438 = vunpack.c.l.b16 %v400
      %v439 = vunpack.c.l.b16 %v401
      %v440 = vunpack.c.l.b16 %v402
      %v441 = vunpack.c.l.b16 %v403
      %v442 = vunpack.c.l.b16 %v404
      %v443 = vunpack.c.l.b16 %v405
      %v444 = vunpack.c.l.b16 %v406
      %v445 = vunpack.c.l.b16 %v407
      %v446 = vunpack.c.l.b16 %v408
      %v447 = vunpack.c.l.b16 %v409
      %v448 = vunpack.c.l.b16 %v410
      %v449 = vunpack.c.l.b16 %v411
      %v450 = vunpack.c.l.b16 %v412
      %v451 = vunpack.c.l.b16 %v413
      %v452 = vunpack.c.l.b16 %v414
      %v453 = vunpack.c.l.b16 %v415
      %v454 = vpack.c.b16 %v436, %v435
      %v455 = vpack.c.b16 %v438, %v437
      %v456 = vpack.c.b16 %v440, %v439
      %v457 = vpack.c.b16 %v442, %v441
      %v458 = vpack.c.b16 %v444, %v443
      %v459 = vpack.c.b16 %v446, %v445
      %v460 = vpack.c.b16 %v448, %v447
      %v461 = vpack.c.b16 %v450, %v449
      %v462 = vpack.c.b16 %v452, %v451
      %v463 = vpack.c.b16 %v453, %v453
      %vm473 = vcmask 154624
      %v475 = vsel %vm473, %v334, 0
      %v478 = vsel %vm473, %v336, 0
      %v481 = vsel %vm473, %v338, 0
      %v484 = vsel %vm473, %v340, 0
      %v487 = vsel %vm473, %v342, 0
      %v490 = vsel %vm473, %v344, 0
      %v493 = vsel %vm473, %v346, 0
      %v496 = vsel %vm473, %v348, 0
      %v499 = vsel %vm473, %v350, 0
      %v502 = vsel %vm473, %v352, 0
      %v505 = vsel %vm473, %v354, 0
      %v508 = vsel %vm473, %v356, 0
      %v511 = vsel %vm473, %v358, 0
      %v514 = vsel %vm473, %v360, 0
      %v517 = vsel %vm473, %v362, 0
      %v520 = vsel %vm473, %v364, 0
      %v523 = vsel %vm473, %v366, 0
      %v526 = vsel %vm473, %v368, 0
      %v529 = vsel %vm473, %v370, 0
      %v532 = vsel %vm473, %v372, 0
      %v535 = vsel %vm473, %v374, 0
      %v538 = vsel %vm473, %v376, 0
      %v541 = vsel %vm473, %v378, 0
      %v544 = vsel %vm473, %v380, 0
      %v547 = vsel %vm473, %v382, 0
      %v550 = vsel %vm473, %v384, 0
      %v553 = vsel %vm473, %v386, 0
      %v556 = vsel %vm473, %v388, 0
      %v559 = vsel %vm473, %v390, 0
      %v562 = vsel %vm473, %v392, 0
      %v565 = vsel %vm473, %v394, 0
      %v568 = vsel %vm473, %v396, 0
      %vm570 = vcmask 1040384
      %vm571 = vcmask 1041408
      %v572 = vsel %vm570, 4294967295, 65535
      %v573 = vsel %vm571, %v572, 0
      %v575 = vand.u32 %v463, %v573
      %577 = vmatpush.bf16.msra.mxu0 %v461
      %578 = vmatpush.bf16.msra.mxu0 %v460
      %579 = vmatpush.bf16.msra.mxu0 %v459
      %580 = vmatpush.bf16.msra.mxu0 %v458
      %581 = vmatpush.bf16.msra.mxu0 %v457
      %582 = vmatpush.bf16.msra.mxu0 %v456
      %583 = vmatpush.bf16.msra.mxu0 %v455
      %584 = vmatpush.bf16.msra.mxu0 %v454
      %585 = vmatmul.bf16.gmra.mxu0 %v333
      %v586 = vpop.f32.mrf.mxu0
      %v587 = vadd.f32 0.0, %v586
      %v588 = vpop.f32.mrf.mxu0
      %v589 = vadd.f32 0.0, %v588
      %590 = vmatmul.bf16.gmra.mxu0 %v335
      %v591 = vpop.f32.mrf.mxu0
      %v592 = vadd.f32 0.0, %v591
      %v593 = vpop.f32.mrf.mxu0
      %v594 = vadd.f32 0.0, %v593
      %595 = vmatmul.bf16.gmra.mxu0 %v337
      %v596 = vpop.f32.mrf.mxu0
      %v597 = vadd.f32 0.0, %v596
      %v598 = vpop.f32.mrf.mxu0
      %v599 = vadd.f32 0.0, %v598
      %600 = vmatmul.bf16.gmra.mxu0 %v339
      %v601 = vpop.f32.mrf.mxu0
      %v602 = vadd.f32 0.0, %v601
      %v603 = vpop.f32.mrf.mxu0
      %v604 = vadd.f32 0.0, %v603
      %605 = vmatmul.bf16.gmra.mxu0 %v341
      %v606 = vpop.f32.mrf.mxu0
      %v607 = vadd.f32 0.0, %v606
      %v608 = vpop.f32.mrf.mxu0
      %v609 = vadd.f32 0.0, %v608
      %610 = vmatmul.bf16.gmra.mxu0 %v343
      %v611 = vpop.f32.mrf.mxu0
      %v612 = vadd.f32 0.0, %v611
      %v613 = vpop.f32.mrf.mxu0
      %v614 = vadd.f32 0.0, %v613
      %615 = vmatmul.bf16.gmra.mxu0 %v345
      %v616 = vpop.f32.mrf.mxu0
      %v617 = vadd.f32 0.0, %v616
      %v618 = vpop.f32.mrf.mxu0
      %v619 = vadd.f32 0.0, %v618
      %620 = vmatmul.bf16.gmra.mxu0 %v347
      %v621 = vpop.f32.mrf.mxu0
      %v622 = vadd.f32 0.0, %v621
      %v623 = vpop.f32.mrf.mxu0
      %v624 = vadd.f32 0.0, %v623
      %625 = vmatmul.bf16.gmra.mxu0 %v349
      %v626 = vpop.f32.mrf.mxu0
      %v627 = vadd.f32 0.0, %v626
      %v628 = vpop.f32.mrf.mxu0
      %v629 = vadd.f32 0.0, %v628
      %630 = vmatmul.bf16.gmra.mxu0 %v351
      %v631 = vpop.f32.mrf.mxu0
      %v632 = vadd.f32 0.0, %v631
      %v633 = vpop.f32.mrf.mxu0
      %v634 = vadd.f32 0.0, %v633
      %635 = vmatmul.bf16.gmra.mxu0 %v353
      %v636 = vpop.f32.mrf.mxu0
      %v637 = vadd.f32 0.0, %v636
      %v638 = vpop.f32.mrf.mxu0
      %v639 = vadd.f32 0.0, %v638
      %640 = vmatmul.bf16.gmra.mxu0 %v355
      %v641 = vpop.f32.mrf.mxu0
      %v642 = vadd.f32 0.0, %v641
      %v643 = vpop.f32.mrf.mxu0
      %v644 = vadd.f32 0.0, %v643
      %645 = vmatmul.bf16.gmra.mxu0 %v357
      %v646 = vpop.f32.mrf.mxu0
      %v647 = vadd.f32 0.0, %v646
      %v648 = vpop.f32.mrf.mxu0
      %v649 = vadd.f32 0.0, %v648
      %650 = vmatmul.bf16.gmra.mxu0 %v359
      %v651 = vpop.f32.mrf.mxu0
      %v652 = vadd.f32 0.0, %v651
      %v653 = vpop.f32.mrf.mxu0
      %v654 = vadd.f32 0.0, %v653
      %655 = vmatmul.bf16.gmra.mxu0 %v361
      %v656 = vpop.f32.mrf.mxu0
      %v657 = vadd.f32 0.0, %v656
      %v658 = vpop.f32.mrf.mxu0
      %v659 = vadd.f32 0.0, %v658
      %660 = vmatmul.bf16.gmra.mxu0 %v363
      %v661 = vpop.f32.mrf.mxu0
      %v662 = vadd.f32 0.0, %v661
      %v663 = vpop.f32.mrf.mxu0
      %v664 = vadd.f32 0.0, %v663
      %665 = vmatmul.bf16.gmra.mxu0 %v365
      %v666 = vpop.f32.mrf.mxu0
      %v667 = vadd.f32 0.0, %v666
      %v668 = vpop.f32.mrf.mxu0
      %v669 = vadd.f32 0.0, %v668
      %670 = vmatmul.bf16.gmra.mxu0 %v367
      %v671 = vpop.f32.mrf.mxu0
      %v672 = vadd.f32 0.0, %v671
      %v673 = vpop.f32.mrf.mxu0
      %v674 = vadd.f32 0.0, %v673
      %675 = vmatmul.bf16.gmra.mxu0 %v369
      %v676 = vpop.f32.mrf.mxu0
      %v677 = vadd.f32 0.0, %v676
      %v678 = vpop.f32.mrf.mxu0
      %v679 = vadd.f32 0.0, %v678
      %680 = vmatmul.bf16.gmra.mxu0 %v371
      %v681 = vpop.f32.mrf.mxu0
      %v682 = vadd.f32 0.0, %v681
      %v683 = vpop.f32.mrf.mxu0
      %v684 = vadd.f32 0.0, %v683
      %685 = vmatmul.bf16.gmra.mxu0 %v373
      %v686 = vpop.f32.mrf.mxu0
      %v687 = vadd.f32 0.0, %v686
      %v688 = vpop.f32.mrf.mxu0
      %v689 = vadd.f32 0.0, %v688
      %690 = vmatmul.bf16.gmra.mxu0 %v375
      %v691 = vpop.f32.mrf.mxu0
      %v692 = vadd.f32 0.0, %v691
      %v693 = vpop.f32.mrf.mxu0
      %v694 = vadd.f32 0.0, %v693
      %695 = vmatmul.bf16.gmra.mxu0 %v377
      %v696 = vpop.f32.mrf.mxu0
      %v697 = vadd.f32 0.0, %v696
      %v698 = vpop.f32.mrf.mxu0
      %v699 = vadd.f32 0.0, %v698
      %700 = vmatmul.bf16.gmra.mxu0 %v379
      %v701 = vpop.f32.mrf.mxu0
      %v702 = vadd.f32 0.0, %v701
      %v703 = vpop.f32.mrf.mxu0
      %v704 = vadd.f32 0.0, %v703
      %705 = vmatmul.bf16.gmra.mxu0 %v381
      %v706 = vpop.f32.mrf.mxu0
      %v707 = vadd.f32 0.0, %v706
      %v708 = vpop.f32.mrf.mxu0
      %v709 = vadd.f32 0.0, %v708
      %710 = vmatmul.bf16.gmra.mxu0 %v383
      %v711 = vpop.f32.mrf.mxu0
      %v712 = vadd.f32 0.0, %v711
      %v713 = vpop.f32.mrf.mxu0
      %v714 = vadd.f32 0.0, %v713
      %715 = vmatmul.bf16.gmra.mxu0 %v385
      %v716 = vpop.f32.mrf.mxu0
      %v717 = vadd.f32 0.0, %v716
      %v718 = vpop.f32.mrf.mxu0
      %v719 = vadd.f32 0.0, %v718
      %720 = vmatmul.bf16.gmra.mxu0 %v387
      %v721 = vpop.f32.mrf.mxu0
      %v722 = vadd.f32 0.0, %v721
      %v723 = vpop.f32.mrf.mxu0
      %v724 = vadd.f32 0.0, %v723
      %725 = vmatmul.bf16.gmra.mxu0 %v389
      %v726 = vpop.f32.mrf.mxu0
      %v727 = vadd.f32 0.0, %v726
      %v728 = vpop.f32.mrf.mxu0
      %v729 = vadd.f32 0.0, %v728
      %730 = vmatmul.bf16.gmra.mxu0 %v391
      %v731 = vpop.f32.mrf.mxu0
      %v732 = vadd.f32 0.0, %v731
      %v733 = vpop.f32.mrf.mxu0
      %v734 = vadd.f32 0.0, %v733
      %735 = vmatmul.bf16.gmra.mxu0 %v393
      %v736 = vpop.f32.mrf.mxu0
      %v737 = vadd.f32 0.0, %v736
      %v738 = vpop.f32.mrf.mxu0
      %v739 = vadd.f32 0.0, %v738
      %740 = vmatmul.bf16.gmra.mxu0 %v395
      %v741 = vpop.f32.mrf.mxu0
      %v742 = vadd.f32 0.0, %v741
      %v743 = vpop.f32.mrf.mxu0
      %v744 = vadd.f32 0.0, %v743
      %745 = vdwg.mxu0
      %746 = vmatpush.bf16.msra.mxu0 0
      %747 = vmatpush.bf16.msra.mxu0 0
      %748 = vmatpush.bf16.msra.mxu0 0
      %749 = vmatpush.bf16.msra.mxu0 0
      %750 = vmatpush.bf16.msra.mxu0 0
      %751 = vmatpush.bf16.msra.mxu0 0
      %752 = vmatpush.bf16.msra.mxu0 %v575
      %753 = vmatpush.bf16.msra.mxu0 %v462
      %754 = vmatmul.bf16.gmra.mxu0 %v475
      %v755 = vpop.f32.mrf.mxu0
      %v756 = vadd.f32 %v587, %v755
      %v757 = vpop.f32.mrf.mxu0
      %v758 = vadd.f32 %v589, %v757
      %759 = vmatmul.bf16.gmra.mxu0 %v478
      %v760 = vpop.f32.mrf.mxu0
      %v761 = vadd.f32 %v592, %v760
      %v762 = vpop.f32.mrf.mxu0
      %v763 = vadd.f32 %v594, %v762
      %764 = vmatmul.bf16.gmra.mxu0 %v481
      %v765 = vpop.f32.mrf.mxu0
      %v766 = vadd.f32 %v597, %v765
      %v767 = vpop.f32.mrf.mxu0
      %v768 = vadd.f32 %v599, %v767
      %769 = vmatmul.bf16.gmra.mxu0 %v484
      %v770 = vpop.f32.mrf.mxu0
      %v771 = vadd.f32 %v602, %v770
      %v772 = vpop.f32.mrf.mxu0
      %v773 = vadd.f32 %v604, %v772
      %774 = vmatmul.bf16.gmra.mxu0 %v487
      %v775 = vpop.f32.mrf.mxu0
      %v776 = vadd.f32 %v607, %v775
      %v777 = vpop.f32.mrf.mxu0
      %v778 = vadd.f32 %v609, %v777
      %779 = vmatmul.bf16.gmra.mxu0 %v490
      %v780 = vpop.f32.mrf.mxu0
      %v781 = vadd.f32 %v612, %v780
      %v782 = vpop.f32.mrf.mxu0
      %v783 = vadd.f32 %v614, %v782
      %784 = vmatmul.bf16.gmra.mxu0 %v493
      %v785 = vpop.f32.mrf.mxu0
      %v786 = vadd.f32 %v617, %v785
      %v787 = vpop.f32.mrf.mxu0
      %v788 = vadd.f32 %v619, %v787
      %789 = vmatmul.bf16.gmra.mxu0 %v496
      %v790 = vpop.f32.mrf.mxu0
      %v791 = vadd.f32 %v622, %v790
      %v792 = vpop.f32.mrf.mxu0
      %v793 = vadd.f32 %v624, %v792
      %794 = vmatmul.bf16.gmra.mxu0 %v499
      %v795 = vpop.f32.mrf.mxu0
      %v796 = vadd.f32 %v627, %v795
      %v797 = vpop.f32.mrf.mxu0
      %v798 = vadd.f32 %v629, %v797
      %799 = vmatmul.bf16.gmra.mxu0 %v502
      %v800 = vpop.f32.mrf.mxu0
      %v801 = vadd.f32 %v632, %v800
      %v802 = vpop.f32.mrf.mxu0
      %v803 = vadd.f32 %v634, %v802
      %804 = vmatmul.bf16.gmra.mxu0 %v505
      %v805 = vpop.f32.mrf.mxu0
      %v806 = vadd.f32 %v637, %v805
      %v807 = vpop.f32.mrf.mxu0
      %v808 = vadd.f32 %v639, %v807
      %809 = vmatmul.bf16.gmra.mxu0 %v508
      %v810 = vpop.f32.mrf.mxu0
      %v811 = vadd.f32 %v642, %v810
      %v812 = vpop.f32.mrf.mxu0
      %v813 = vadd.f32 %v644, %v812
      %814 = vmatmul.bf16.gmra.mxu0 %v511
      %v815 = vpop.f32.mrf.mxu0
      %v816 = vadd.f32 %v647, %v815
      %v817 = vpop.f32.mrf.mxu0
      %v818 = vadd.f32 %v649, %v817
      %819 = vmatmul.bf16.gmra.mxu0 %v514
      %v820 = vpop.f32.mrf.mxu0
      %v821 = vadd.f32 %v652, %v820
      %v822 = vpop.f32.mrf.mxu0
      %v823 = vadd.f32 %v654, %v822
      %824 = vmatmul.bf16.gmra.mxu0 %v517
      %v825 = vpop.f32.mrf.mxu0
      %v826 = vadd.f32 %v657, %v825
      %v827 = vpop.f32.mrf.mxu0
      %v828 = vadd.f32 %v659, %v827
      %829 = vmatmul.bf16.gmra.mxu0 %v520
      %v830 = vpop.f32.mrf.mxu0
      %v831 = vadd.f32 %v662, %v830
      %v832 = vpop.f32.mrf.mxu0
      %v833 = vadd.f32 %v664, %v832
      %834 = vmatmul.bf16.gmra.mxu0 %v523
      %v835 = vpop.f32.mrf.mxu0
      %v836 = vadd.f32 %v667, %v835
      %v837 = vpop.f32.mrf.mxu0
      %v838 = vadd.f32 %v669, %v837
      %839 = vmatmul.bf16.gmra.mxu0 %v526
      %v840 = vpop.f32.mrf.mxu0
      %v841 = vadd.f32 %v672, %v840
      %v842 = vpop.f32.mrf.mxu0
      %v843 = vadd.f32 %v674, %v842
      %844 = vmatmul.bf16.gmra.mxu0 %v529
      %v845 = vpop.f32.mrf.mxu0
      %v846 = vadd.f32 %v677, %v845
      %v847 = vpop.f32.mrf.mxu0
      %v848 = vadd.f32 %v679, %v847
      %849 = vmatmul.bf16.gmra.mxu0 %v532
      %v850 = vpop.f32.mrf.mxu0
      %v851 = vadd.f32 %v682, %v850
      %v852 = vpop.f32.mrf.mxu0
      %v853 = vadd.f32 %v684, %v852
      %854 = vmatmul.bf16.gmra.mxu0 %v535
      %v855 = vpop.f32.mrf.mxu0
      %v856 = vadd.f32 %v687, %v855
      %v857 = vpop.f32.mrf.mxu0
      %v858 = vadd.f32 %v689, %v857
      %859 = vmatmul.bf16.gmra.mxu0 %v538
      %v860 = vpop.f32.mrf.mxu0
      %v861 = vadd.f32 %v692, %v860
      %v862 = vpop.f32.mrf.mxu0
      %v863 = vadd.f32 %v694, %v862
      %864 = vmatmul.bf16.gmra.mxu0 %v541
      %v865 = vpop.f32.mrf.mxu0
      %v866 = vadd.f32 %v697, %v865
      %v867 = vpop.f32.mrf.mxu0
      %v868 = vadd.f32 %v699, %v867
      %869 = vmatmul.bf16.gmra.mxu0 %v544
      %v870 = vpop.f32.mrf.mxu0
      %v871 = vadd.f32 %v702, %v870
      %v872 = vpop.f32.mrf.mxu0
      %v873 = vadd.f32 %v704, %v872
      %874 = vmatmul.bf16.gmra.mxu0 %v547
      %v875 = vpop.f32.mrf.mxu0
      %v876 = vadd.f32 %v707, %v875
      %v877 = vpop.f32.mrf.mxu0
      %v878 = vadd.f32 %v709, %v877
      %879 = vmatmul.bf16.gmra.mxu0 %v550
      %v880 = vpop.f32.mrf.mxu0
      %v881 = vadd.f32 %v712, %v880
      %v882 = vpop.f32.mrf.mxu0
      %v883 = vadd.f32 %v714, %v882
      %884 = vmatmul.bf16.gmra.mxu0 %v553
      %v885 = vpop.f32.mrf.mxu0
      %v886 = vadd.f32 %v717, %v885
      %v887 = vpop.f32.mrf.mxu0
      %v888 = vadd.f32 %v719, %v887
      %889 = vmatmul.bf16.gmra.mxu0 %v556
      %v890 = vpop.f32.mrf.mxu0
      %v891 = vadd.f32 %v722, %v890
      %v892 = vpop.f32.mrf.mxu0
      %v893 = vadd.f32 %v724, %v892
      %894 = vmatmul.bf16.gmra.mxu0 %v559
      %v895 = vpop.f32.mrf.mxu0
      %v896 = vadd.f32 %v727, %v895
      %v897 = vpop.f32.mrf.mxu0
      %v898 = vadd.f32 %v729, %v897
      %899 = vmatmul.bf16.gmra.mxu0 %v562
      %v900 = vpop.f32.mrf.mxu0
      %v901 = vadd.f32 %v732, %v900
      %v902 = vpop.f32.mrf.mxu0
      %v903 = vadd.f32 %v734, %v902
      %904 = vmatmul.bf16.gmra.mxu0 %v565
      %v905 = vpop.f32.mrf.mxu0
      %v906 = vadd.f32 %v737, %v905
      %v907 = vpop.f32.mrf.mxu0
      %v908 = vadd.f32 %v739, %v907
      %909 = vmatmul.bf16.gmra.mxu0 %v568
      %v910 = vpop.f32.mrf.mxu0
      %v911 = vadd.f32 %v742, %v910
      %v912 = vpop.f32.mrf.mxu0
      %v913 = vadd.f32 %v744, %v912
      %914 = vdwg.mxu0
      %v915 = vld [vmem:[%s2] sm:$0x1]
      %v917 = vperm.slane %v915, 0
      %v919 = vmul.f32 %v756, %v917
      %v920 = vmul.f32 %v758, %v917
      %v921 = vmul.f32 %v761, %v917
      %v922 = vmul.f32 %v763, %v917
      %v923 = vmul.f32 %v766, %v917
      %v924 = vmul.f32 %v768, %v917
      %v925 = vmul.f32 %v771, %v917
      %v926 = vmul.f32 %v773, %v917
      %v927 = vmul.f32 %v776, %v917
      %v928 = vmul.f32 %v778, %v917
      %v929 = vmul.f32 %v781, %v917
      %v930 = vmul.f32 %v783, %v917
      %v931 = vmul.f32 %v786, %v917
      %v932 = vmul.f32 %v788, %v917
      %v933 = vmul.f32 %v791, %v917
      %v934 = vmul.f32 %v793, %v917
      %v935 = vmul.f32 %v796, %v917
      %v936 = vmul.f32 %v798, %v917
      %v937 = vmul.f32 %v801, %v917
      %v938 = vmul.f32 %v803, %v917
      %v939 = vmul.f32 %v806, %v917
      %v940 = vmul.f32 %v808, %v917
      %v941 = vmul.f32 %v811, %v917
      %v942 = vmul.f32 %v813, %v917
      %v943 = vmul.f32 %v816, %v917
      %v944 = vmul.f32 %v818, %v917
      %v945 = vmul.f32 %v821, %v917
      %v946 = vmul.f32 %v823, %v917
      %v947 = vmul.f32 %v826, %v917
      %v948 = vmul.f32 %v828, %v917
      %v949 = vmul.f32 %v831, %v917
      %v950 = vmul.f32 %v833, %v917
      %v951 = vmul.f32 %v836, %v917
      %v952 = vmul.f32 %v838, %v917
      %v953 = vmul.f32 %v841, %v917
      %v954 = vmul.f32 %v843, %v917
      %v955 = vmul.f32 %v846, %v917
      %v956 = vmul.f32 %v848, %v917
      %v957 = vmul.f32 %v851, %v917
      %v958 = vmul.f32 %v853, %v917
      %v959 = vmul.f32 %v856, %v917
      %v960 = vmul.f32 %v858, %v917
      %v961 = vmul.f32 %v861, %v917
      %v962 = vmul.f32 %v863, %v917
      %v963 = vmul.f32 %v866, %v917
      %v964 = vmul.f32 %v868, %v917
      %v965 = vmul.f32 %v871, %v917
      %v966 = vmul.f32 %v873, %v917
      %v967 = vmul.f32 %v876, %v917
      %v968 = vmul.f32 %v878, %v917
      %v969 = vmul.f32 %v881, %v917
      %v970 = vmul.f32 %v883, %v917
      %v971 = vmul.f32 %v886, %v917
      %v972 = vmul.f32 %v888, %v917
      %v973 = vmul.f32 %v891, %v917
      %v974 = vmul.f32 %v893, %v917
      %v975 = vmul.f32 %v896, %v917
      %v976 = vmul.f32 %v898, %v917
      %v977 = vmul.f32 %v901, %v917
      %v978 = vmul.f32 %v903, %v917
      %v979 = vmul.f32 %v906, %v917
      %v980 = vmul.f32 %v908, %v917
      %v981 = vmul.f32 %v911, %v917
      %v982 = vmul.f32 %v913, %v917
      %v983 = vld [vmem:[%s3] sm:$0x1]
      %v985 = vperm.slane %v983, 0
      %v987 = vadd.f32 %v919, %v985
      %v988 = vadd.f32 %v920, %v985
      %v989 = vadd.f32 %v921, %v985
      %v990 = vadd.f32 %v922, %v985
      %v991 = vadd.f32 %v923, %v985
      %v992 = vadd.f32 %v924, %v985
      %v993 = vadd.f32 %v925, %v985
      %v994 = vadd.f32 %v926, %v985
      %v995 = vadd.f32 %v927, %v985
      %v996 = vadd.f32 %v928, %v985
      %v997 = vadd.f32 %v929, %v985
      %v998 = vadd.f32 %v930, %v985
      %v999 = vadd.f32 %v931, %v985
      %v1000 = vadd.f32 %v932, %v985
      %v1001 = vadd.f32 %v933, %v985
      %v1002 = vadd.f32 %v934, %v985
      %v1003 = vadd.f32 %v935, %v985
      %v1004 = vadd.f32 %v936, %v985
      %v1005 = vadd.f32 %v937, %v985
      %v1006 = vadd.f32 %v938, %v985
      %v1007 = vadd.f32 %v939, %v985
      %v1008 = vadd.f32 %v940, %v985
      %v1009 = vadd.f32 %v941, %v985
      %v1010 = vadd.f32 %v942, %v985
      %v1011 = vadd.f32 %v943, %v985
      %v1012 = vadd.f32 %v944, %v985
      %v1013 = vadd.f32 %v945, %v985
      %v1014 = vadd.f32 %v946, %v985
      %v1015 = vadd.f32 %v947, %v985
      %v1016 = vadd.f32 %v948, %v985
      %v1017 = vadd.f32 %v949, %v985
      %v1018 = vadd.f32 %v950, %v985
      %v1019 = vadd.f32 %v951, %v985
      %v1020 = vadd.f32 %v952, %v985
      %v1021 = vadd.f32 %v953, %v985
      %v1022 = vadd.f32 %v954, %v985
      %v1023 = vadd.f32 %v955, %v985
      %v1024 = vadd.f32 %v956, %v985
      %v1025 = vadd.f32 %v957, %v985
      %v1026 = vadd.f32 %v958, %v985
      %v1027 = vadd.f32 %v959, %v985
      %v1028 = vadd.f32 %v960, %v985
      %v1029 = vadd.f32 %v961, %v985
      %v1030 = vadd.f32 %v962, %v985
      %v1031 = vadd.f32 %v963, %v985
      %v1032 = vadd.f32 %v964, %v985
      %v1033 = vadd.f32 %v965, %v985
      %v1034 = vadd.f32 %v966, %v985
      %v1035 = vadd.f32 %v967, %v985
      %v1036 = vadd.f32 %v968, %v985
      %v1037 = vadd.f32 %v969, %v985
      %v1038 = vadd.f32 %v970, %v985
      %v1039 = vadd.f32 %v971, %v985
      %v1040 = vadd.f32 %v972, %v985
      %v1041 = vadd.f32 %v973, %v985
      %v1042 = vadd.f32 %v974, %v985
      %v1043 = vadd.f32 %v975, %v985
      %v1044 = vadd.f32 %v976, %v985
      %v1045 = vadd.f32 %v977, %v985
      %v1046 = vadd.f32 %v978, %v985
      %v1047 = vadd.f32 %v979, %v985
      %v1048 = vadd.f32 %v980, %v985
      %v1049 = vadd.f32 %v981, %v985
      %v1050 = vadd.f32 %v982, %v985
      %v1051 = vmax.f32 %v987, 0.0
      %v1052 = vmax.f32 %v988, 0.0
      %v1053 = vmax.f32 %v989, 0.0
      %v1054 = vmax.f32 %v990, 0.0
      %v1055 = vmax.f32 %v991, 0.0
      %v1056 = vmax.f32 %v992, 0.0
      %v1057 = vmax.f32 %v993, 0.0
      %v1058 = vmax.f32 %v994, 0.0
      %v1059 = vmax.f32 %v995, 0.0
      %v1060 = vmax.f32 %v996, 0.0
      %v1061 = vmax.f32 %v997, 0.0
      %v1062 = vmax.f32 %v998, 0.0
      %v1063 = vmax.f32 %v999, 0.0
      %v1064 = vmax.f32 %v1000, 0.0
      %v1065 = vmax.f32 %v1001, 0.0
      %v1066 = vmax.f32 %v1002, 0.0
      %v1067 = vmax.f32 %v1003, 0.0
      %v1068 = vmax.f32 %v1004, 0.0
      %v1069 = vmax.f32 %v1005, 0.0
      %v1070 = vmax.f32 %v1006, 0.0
      %v1071 = vmax.f32 %v1007, 0.0
      %v1072 = vmax.f32 %v1008, 0.0
      %v1073 = vmax.f32 %v1009, 0.0
      %v1074 = vmax.f32 %v1010, 0.0
      %v1075 = vmax.f32 %v1011, 0.0
      %v1076 = vmax.f32 %v1012, 0.0
      %v1077 = vmax.f32 %v1013, 0.0
      %v1078 = vmax.f32 %v1014, 0.0
      %v1079 = vmax.f32 %v1015, 0.0
      %v1080 = vmax.f32 %v1016, 0.0
      %v1081 = vmax.f32 %v1017, 0.0
      %v1082 = vmax.f32 %v1018, 0.0
      %v1083 = vmax.f32 %v1019, 0.0
      %v1084 = vmax.f32 %v1020, 0.0
      %v1085 = vmax.f32 %v1021, 0.0
      %v1086 = vmax.f32 %v1022, 0.0
      %v1087 = vmax.f32 %v1023, 0.0
      %v1088 = vmax.f32 %v1024, 0.0
      %v1089 = vmax.f32 %v1025, 0.0
      %v1090 = vmax.f32 %v1026, 0.0
      %v1091 = vmax.f32 %v1027, 0.0
      %v1092 = vmax.f32 %v1028, 0.0
      %v1093 = vmax.f32 %v1029, 0.0
      %v1094 = vmax.f32 %v1030, 0.0
      %v1095 = vmax.f32 %v1031, 0.0
      %v1096 = vmax.f32 %v1032, 0.0
      %v1097 = vmax.f32 %v1033, 0.0
      %v1098 = vmax.f32 %v1034, 0.0
      %v1099 = vmax.f32 %v1035, 0.0
      %v1100 = vmax.f32 %v1036, 0.0
      %v1101 = vmax.f32 %v1037, 0.0
      %v1102 = vmax.f32 %v1038, 0.0
      %v1103 = vmax.f32 %v1039, 0.0
      %v1104 = vmax.f32 %v1040, 0.0
      %v1105 = vmax.f32 %v1041, 0.0
      %v1106 = vmax.f32 %v1042, 0.0
      %v1107 = vmax.f32 %v1043, 0.0
      %v1108 = vmax.f32 %v1044, 0.0
      %v1109 = vmax.f32 %v1045, 0.0
      %v1110 = vmax.f32 %v1046, 0.0
      %v1111 = vmax.f32 %v1047, 0.0
      %v1112 = vmax.f32 %v1048, 0.0
      %v1113 = vmax.f32 %v1049, 0.0
      %v1114 = vmax.f32 %v1050, 0.0
      %vm1115 = vcmask 523264
      %1116 = vst.msk [vmem:[%s202] sm:$0xff] %vm1115, %v1051
      %1117 = vst.msk [vmem:[%s202 + $0x8] sm:$0xff] %vm1115, %v1052
      %1118 = vst.msk [vmem:[%s202 + $0x10] sm:$0xff] %vm1115, %v1053
      %1119 = vst.msk [vmem:[%s202 + $0x18] sm:$0xff] %vm1115, %v1054
      %1120 = vst.msk [vmem:[%s202 + $0x20] sm:$0xff] %vm1115, %v1055
      %1121 = vst.msk [vmem:[%s202 + $0x28] sm:$0xff] %vm1115, %v1056
      %1122 = vst.msk [vmem:[%s202 + $0x30] sm:$0xff] %vm1115, %v1057
      %1123 = vst.msk [vmem:[%s202 + $0x38] sm:$0xff] %vm1115, %v1058
      %1124 = vst.msk [vmem:[%s202 + $0x40] sm:$0xff] %vm1115, %v1059
      %1125 = vst.msk [vmem:[%s202 + $0x48] sm:$0xff] %vm1115, %v1060
      %1126 = vst.msk [vmem:[%s202 + $0x50] sm:$0xff] %vm1115, %v1061
      %1127 = vst.msk [vmem:[%s202 + $0x58] sm:$0xff] %vm1115, %v1062
      %1128 = vst.msk [vmem:[%s202 + $0x60] sm:$0xff] %vm1115, %v1063
      %1129 = vst.msk [vmem:[%s202 + $0x68] sm:$0xff] %vm1115, %v1064
      %1130 = vst.msk [vmem:[%s202 + $0x70] sm:$0xff] %vm1115, %v1065
      %1131 = vst.msk [vmem:[%s202 + $0x78] sm:$0xff] %vm1115, %v1066
      %1132 = vst.msk [vmem:[%s202 + $0x80] sm:$0xff] %vm1115, %v1067
      %1133 = vst.msk [vmem:[%s202 + $0x88] sm:$0xff] %vm1115, %v1068
      %1134 = vst.msk [vmem:[%s202 + $0x90] sm:$0xff] %vm1115, %v1069
      %1135 = vst.msk [vmem:[%s202 + $0x98] sm:$0xff] %vm1115, %v1070
      %1136 = vst.msk [vmem:[%s202 + $0xa0] sm:$0xff] %vm1115, %v1071
      %1137 = vst.msk [vmem:[%s202 + $0xa8] sm:$0xff] %vm1115, %v1072
      %1138 = vst.msk [vmem:[%s202 + $0xb0] sm:$0xff] %vm1115, %v1073
      %1139 = vst.msk [vmem:[%s202 + $0xb8] sm:$0xff] %vm1115, %v1074
      %1140 = vst.msk [vmem:[%s202 + $0xc0] sm:$0xff] %vm1115, %v1075
      %1141 = vst.msk [vmem:[%s202 + $0xc8] sm:$0xff] %vm1115, %v1076
      %1142 = vst.msk [vmem:[%s202 + $0xd0] sm:$0xff] %vm1115, %v1077
      %1143 = vst.msk [vmem:[%s202 + $0xd8] sm:$0xff] %vm1115, %v1078
      %1144 = vst.msk [vmem:[%s202 + $0xe0] sm:$0xff] %vm1115, %v1079
      %1145 = vst.msk [vmem:[%s202 + $0xe8] sm:$0xff] %vm1115, %v1080
      %1146 = vst.msk [vmem:[%s202 + $0xf0] sm:$0xff] %vm1115, %v1081
      %1147 = vst.msk [vmem:[%s202 + $0xf8] sm:$0xff] %vm1115, %v1082
      %1148 = vst.msk [vmem:[%s202 + $0x100] sm:$0xff] %vm1115, %v1083
      %1149 = vst.msk [vmem:[%s202 + $0x108] sm:$0xff] %vm1115, %v1084
      %1150 = vst.msk [vmem:[%s202 + $0x110] sm:$0xff] %vm1115, %v1085
      %1151 = vst.msk [vmem:[%s202 + $0x118] sm:$0xff] %vm1115, %v1086
      %1152 = vst.msk [vmem:[%s202 + $0x120] sm:$0xff] %vm1115, %v1087
      %1153 = vst.msk [vmem:[%s202 + $0x128] sm:$0xff] %vm1115, %v1088
      %1154 = vst.msk [vmem:[%s202 + $0x130] sm:$0xff] %vm1115, %v1089
      %1155 = vst.msk [vmem:[%s202 + $0x138] sm:$0xff] %vm1115, %v1090
      %1156 = vst.msk [vmem:[%s202 + $0x140] sm:$0xff] %vm1115, %v1091
      %1157 = vst.msk [vmem:[%s202 + $0x148] sm:$0xff] %vm1115, %v1092
      %1158 = vst.msk [vmem:[%s202 + $0x150] sm:$0xff] %vm1115, %v1093
      %1159 = vst.msk [vmem:[%s202 + $0x158] sm:$0xff] %vm1115, %v1094
      %1160 = vst.msk [vmem:[%s202 + $0x160] sm:$0xff] %vm1115, %v1095
      %1161 = vst.msk [vmem:[%s202 + $0x168] sm:$0xff] %vm1115, %v1096
      %1162 = vst.msk [vmem:[%s202 + $0x170] sm:$0xff] %vm1115, %v1097
      %1163 = vst.msk [vmem:[%s202 + $0x178] sm:$0xff] %vm1115, %v1098
      %1164 = vst.msk [vmem:[%s202 + $0x180] sm:$0xff] %vm1115, %v1099
      %1165 = vst.msk [vmem:[%s202 + $0x188] sm:$0xff] %vm1115, %v1100
      %1166 = vst.msk [vmem:[%s202 + $0x190] sm:$0xff] %vm1115, %v1101
      %1167 = vst.msk [vmem:[%s202 + $0x198] sm:$0xff] %vm1115, %v1102
      %1168 = vst.msk [vmem:[%s202 + $0x1a0] sm:$0xff] %vm1115, %v1103
      %1169 = vst.msk [vmem:[%s202 + $0x1a8] sm:$0xff] %vm1115, %v1104
      %1170 = vst.msk [vmem:[%s202 + $0x1b0] sm:$0xff] %vm1115, %v1105
      %1171 = vst.msk [vmem:[%s202 + $0x1b8] sm:$0xff] %vm1115, %v1106
      %1172 = vst.msk [vmem:[%s202 + $0x1c0] sm:$0xff] %vm1115, %v1107
      %1173 = vst.msk [vmem:[%s202 + $0x1c8] sm:$0xff] %vm1115, %v1108
      %1174 = vst.msk [vmem:[%s202 + $0x1d0] sm:$0xff] %vm1115, %v1109
      %1175 = vst.msk [vmem:[%s202 + $0x1d8] sm:$0xff] %vm1115, %v1110
      %1176 = vst.msk [vmem:[%s202 + $0x1e0] sm:$0xff] %vm1115, %v1111
      %1177 = vst.msk [vmem:[%s202 + $0x1e8] sm:$0xff] %vm1115, %v1112
      %1178 = vst.msk [vmem:[%s202 + $0x1f0] sm:$0xff] %vm1115, %v1113
      %1179 = vst.msk [vmem:[%s202 + $0x1f8] sm:$0xff] %vm1115, %v1114
      %s1180 = smul.u32 64, %s15
      %p1181 = scmp.lt.s32.totalorder %s1180, 255
      %s1182 = scalar_select %p1181, %s1180, 255
      %s1183 = smul.addr %s1182, 8
      %s1184 = scalar_lea.vmem %s4, %s1183
      // Predicated region
      $region37: #{tpu_custom_call.1} parent=35 // pred_check
        %p1185 = pneg %p122
      $region38: #{tpu_custom_call.1} parent=35 // pred_check_branch
        %1187 = sbr.rel (%p1185) target = $region40
      $region39: #{tpu_custom_call.1} parent=35 // pred_region
        %s1188 = smul.u32 64, %s15
      $region40: #{tpu_custom_call.1} parent=35 // pred_fallthru
        _
    $region36: #{tpu_custom_call.1} parent=5 // pred_fallthru
      _
    %p1189 = scmp.le.s32.totalorder 2, %s10
    // Predicated region
    $region41: #{tpu_custom_call.1} parent=5 // pred_check
      %p1190 = pneg %p1189
    $region42: #{tpu_custom_call.1} parent=5 // pred_check_branch
      %1192 = sbr.rel (%p1190) target = $region44
    $region43: #{tpu_custom_call.1} parent=5 // pred_region
      %s1193 = ssub.s32 %s10, 2
      // Predicated region
      $region45: #{tpu_custom_call.1} parent=43 // pred_check
        %p1194 = pneg %p128
      $region46: #{tpu_custom_call.1} parent=43 // pred_check_branch
        %1196 = sbr.rel (%p1194) target = $region48
      $region47: #{tpu_custom_call.1} parent=43 // pred_region
        %s1197 = smul.u32 64, %s16
        %p1198 = scmp.lt.s32.totalorder %s1197, 255
        %s1199 = scalar_select %p1198, %s1197, 255
        %s1200 = smul.addr %s1199, 8
        %s1201 = scalar_lea.vmem %s4, %s1200
      $region48: #{tpu_custom_call.1} parent=43 // pred_fallthru
        _
    $region44: #{tpu_custom_call.1} parent=5 // pred_fallthru
      _
  $region6: #{tpu_custom_call.1} parent=0 // loop_footer
    %s14 = sadd.s32 1, %s10
  $region7: #{tpu_custom_call.1} parent=0 // loop_footer_branch
    %9 = sbr.rel target = $region3
  $region8: #{tpu_custom_call.1} parent=0 // loop_exit
    _

</llo_original>
